<compile_context>
chip_gen: v5e
topology: v5e:2x2
jax: 0.10.0
libtpu: 0.0.40
codegen_flags: <defaults>
</compile_context>

<pallas_src>
import jax
import jax.numpy as jnp
from jax.experimental import pallas as pl
from jax.experimental.pallas import tpu as pltpu


def _ce_partial_kernel(outcls_ref, label_ref, out_ref):
    """Per-N-tile partials of the weighted cross entropy (ignore_index=-1)."""
    tn, C = outcls_ref.shape

    x = outcls_ref[...]                                   # input dtype (f32/bf16)
    lab = label_ref[...]                                  # (tn, 1) int32

    # Row max is exact in the input dtype; subtraction is safe after the shift.
    m = jnp.max(x, axis=-1, keepdims=True)                # (tn, 1)
    xs = (x - m).astype(jnp.float32)                      # single deferred cast

    col = jax.lax.broadcasted_iota(jnp.int32, (tn, C), 1)
    lse_s = jnp.log(jnp.sum(jnp.exp(xs), axis=-1, keepdims=True))       # (tn, 1)
    # fused "picked" logit (no one-hot materialization); shift cancels in nll
    picked_s = jnp.sum(jnp.where(col == lab, xs, 0.0), axis=-1, keepdims=True)
    nll = lse_s - picked_s                                # (tn, 1)

    valid = lab != -1                                     # padded rows carry -1
    w = jnp.where(lab == C - 1, 0.1, 1.0)                 # "unknown" class weight
    wv = jnp.where(valid, w, 0.0).astype(jnp.float32)     # (tn, 1)

    num = jnp.sum(wv * nll)                               # scalar
    den = jnp.sum(wv)                                     # scalar

    lane = jax.lax.broadcasted_iota(jnp.int32, (1, 1, 128), 2)
    out_ref[...] = jnp.where(
        lane == 0, num,
        jnp.where(lane == 1, den, 0.0)).astype(jnp.float32)


def osdan_loss(proto, outcls, label_flatten, cfgs, *, tn=None):
    """JAX wrapper mirroring osdanloss.forward (outcos=None / wsim=0 path)."""
    wcls = float(cfgs['wcls'])
    wemb = float(cfgs['wemb'])
    # wmar > 0 / wsim > 0 branches unavailable (submodule sources not given).
    assert float(cfgs.get('wmar', 0.0)) == 0.0
    assert float(cfgs.get('wsim', 0.0)) == 0.0

    # ---- proto loss: relu(proto[1:] @ proto[1:].T - 0.14).mean() ----
    # Tiny one-shot gram; plain jnp lets XLA fuse it into the final combine
    # and keeps it out of the per-tile Pallas pipeline entirely.
    p = proto[1:]
    gram = (p @ p.T).astype(jnp.float32)
    proto_loss = jnp.mean(jnp.maximum(gram - 0.14, 0.0))

    N, C = outcls.shape
    label2 = label_flatten.reshape(N, 1).astype(jnp.int32)
    in_bytes = jnp.dtype(outcls.dtype).itemsize

    # ---- generation-aware tile selection ----
    try:
        info = pltpu.get_tpu_info()
        vmem_cap = int(getattr(info, "vmem_capacity_bytes", 64 << 20))
    except Exception:
        vmem_cap = 64 << 20                       # conservative (v7x per-TC)
    tile_budget = min(vmem_cap // 2, 48 << 20)
    # per-row VMEM cost: double-buffered input tile + f32 shifted copy + exp temp
    per_row = C * (2 * in_bytes + 4 + 4) + 64
    n_align = ((N + 15) // 16) * 16
    if tn is None:
        tn = tile_budget // per_row
    tn = max(16, (int(tn) // 16) * 16)            # multiple of 16 (bf16 packing)
    tn = min(tn, 2048, n_align)
    # keep >= 2 grid steps when N allows, so "parallel" can split across
    # v7x's two TensorCores instead of collapsing to a single step.
    if n_align >= 32:
        half = ((pl.cdiv(N, 2) + 15) // 16) * 16
        tn = min(tn, half)

    num_tiles = pl.cdiv(N, tn)
    Np = num_tiles * tn
    if Np != N:
        # Pad with ignore_index rows so partial sums stay exact.
        outcls_p = jnp.pad(outcls, ((0, Np - N), (0, 0)))
        label2 = jnp.pad(label2, ((0, Np - N), (0, 0)), constant_values=-1)
    else:
        outcls_p = outcls

    # Explicit scoped-VMEM budget: double-buffered input tile + f32 temps + headroom.
    needed = 2 * tn * C * in_bytes + 2 * tn * C * 4 + (4 << 20)
    vmem_limit = int(min(max(vmem_cap - (2 << 20), 16 << 20),
                         max(needed, 16 << 20)))

    cost = pl.CostEstimate(
        flops=6 * Np * C,
        transcendentals=Np * C + Np,
        bytes_accessed=Np * C * in_bytes + Np * 4 + num_tiles * 128 * 4)

    parts = pl.pallas_call(
        _ce_partial_kernel,
        grid=(num_tiles,),
        in_specs=[
            pl.BlockSpec((tn, C), lambda i: (i, 0)),   # outcls tile
            pl.BlockSpec((tn, 1), lambda i: (i, 0)),   # labels tile
        ],
        out_specs=pl.BlockSpec((1, 1, 128), lambda i: (i, 0, 0)),
        out_shape=jax.ShapeDtypeStruct((num_tiles, 1, 128), jnp.float32),
        compiler_params=pltpu.CompilerParams(
            dimension_semantics=("parallel",),
            vmem_limit_bytes=vmem_limit),
        cost_estimate=cost,
    )(outcls_p, label2)

    num = jnp.sum(parts[:, 0, 0])
    den = jnp.sum(parts[:, 0, 1])
    clsloss = num / den                 # NaN if all labels ignored (matches torch)
    loss = wcls * clsloss + wemb * proto_loss
    terms = {'total': loss, 'main': clsloss, 'emb': proto_loss}
    return loss, terms


def _ref_loss(proto, outcls, label, wcls, wemb):
    """Pure-JAX reference reproducing the PyTorch semantics."""
    p = proto[1:]
    proto_loss = jnp.mean(jax.nn.relu(p @ p.T - 0.14))
    C = outcls.shape[-1]
    logp = jax.nn.log_softmax(outcls.astype(jnp.float32), axis=-1)
    valid = label != -1
    safe = jnp.where(valid, label, 0)
    nll = -jnp.take_along_axis(logp, safe[:, None], axis=1)[:, 0]
    w = jnp.where(safe == C - 1, 0.1, 1.0)
    num = jnp.sum(jnp.where(valid, w * nll, 0.0))
    den = jnp.sum(jnp.where(valid, w, 0.0))
    clsloss = num / den
    return wcls * clsloss + wemb * proto_loss, clsloss, proto_loss


if __name__ == "__main__":
    key = jax.random.PRNGKey(0)
    kp, kx, kl = jax.random.split(key, 3)

    Cp, D = 40, 32      # prototypes (row 0 excluded from proto loss)
    N, C = 19, 40       # samples x classes; N not a tile multiple (exercises padding)

    proto = jax.random.normal(kp, (Cp, D), dtype=jnp.float32)
    proto = proto / jnp.linalg.norm(proto, axis=-1, keepdims=True)
    outcls = jax.random.normal(kx, (N, C), dtype=jnp.float32)
    label = jax.random.randint(kl, (N,), 0, C, dtype=jnp.int32)
    label = label.at[3].set(-1)          # exercise ignore_index=-1
    label = label.at[7].set(C - 1)       # exercise "unknown" class weight 0.1

    cfgs = {'wcls': 1.0, 'wsim': 0.0, 'wemb': 0.3, 'wmar': 0.0}

    ref_loss, ref_cls, ref_emb = _ref_loss(proto, outcls, label,
                                           cfgs['wcls'], cfgs['wemb'])

    # Auto-derived tile (VMEM-budget path).
    loss, terms = osdan_loss(proto, outcls, label, cfgs)
    jax.block_until_ready(loss)
    assert jnp.allclose(loss, ref_loss, rtol=1e-4, atol=1e-5), (loss, ref_loss)
    assert jnp.allclose(terms['main'], ref_cls, rtol=1e-4, atol=1e-5)
    assert jnp.allclose(terms['emb'], ref_emb, rtol=1e-4, atol=1e-5)

    # Explicit small tile (exercises padding + multi-step "parallel" grid).
    loss2, terms2 = osdan_loss(proto, outcls, label, cfgs, tn=16)
    jax.block_until_ready(loss2)
    assert jnp.allclose(loss2, ref_loss, rtol=1e-4, atol=1e-5), (loss2, ref_loss)
    assert jnp.allclose(terms2['main'], ref_cls, rtol=1e-4, atol=1e-5)
    assert jnp.allclose(terms2['emb'], ref_emb, rtol=1e-4, atol=1e-5)

    print("KERNEL_OK")
</pallas_src>

<mosaic_0001>
module attributes {stable_mosaic.version = 11 : i64} {
  func.func @_ce_partial_kernel(%arg0: i32, %arg1: memref<16x40xf32, #tpu.memory_space<vmem>>, %arg2: memref<16x1xi32, #tpu.memory_space<vmem>>, %arg3: memref<1x1x128xf32, #tpu.memory_space<vmem>>) attributes {dimension_semantics = [#tpu.dimension_semantics<parallel>], iteration_bounds = array<i64: 2>, scalar_prefetch = 0 : i64, scratch_operands = 0 : i64, tpu.core_type = #tpu.core_type<tc>, window_params = [{transform_indices = @transform_0, window_bounds = array<i64: 16, 40>}, {transform_indices = @transform_1, window_bounds = array<i64: 16, 1>}, {transform_indices = @transform_2, window_bounds = array<i64: 1, 1, 128>}]} {
    %c0 = arith.constant 0 : index
    %c0_0 = arith.constant 0 : index
    %0 = vector.load %arg1[%c0, %c0_0] : memref<16x40xf32, #tpu.memory_space<vmem>>, vector<16x40xf32>
    %c0_1 = arith.constant 0 : index
    %c0_2 = arith.constant 0 : index
    %1 = vector.load %arg2[%c0_1, %c0_2] : memref<16x1xi32, #tpu.memory_space<vmem>>, vector<16x1xi32>
    %cst = arith.constant dense<0xFF800000> : vector<16xf32>
    %2 = vector.multi_reduction <maximumf>, %0, %cst [1] : vector<16x40xf32> to vector<16xf32>
    %3 = vector.shape_cast %2 : vector<16xf32> to vector<16x1xf32>
    %4 = vector.broadcast %3 : vector<16x1xf32> to vector<16x40xf32>
    %5 = arith.subf %0, %4 : vector<16x40xf32>
    %6 = tpu.iota {dimensions = array<i32: 1>} : vector<16x40xi32>
    %7 = math.exp %5 : vector<16x40xf32>
    %cst_3 = arith.constant dense<0.000000e+00> : vector<16xf32>
    %8 = vector.multi_reduction <add>, %7, %cst_3 [1] : vector<16x40xf32> to vector<16xf32>
    %9 = vector.shape_cast %8 : vector<16xf32> to vector<16x1xf32>
    %10 = math.log %9 : vector<16x1xf32>
    %11 = vector.broadcast %1 : vector<16x1xi32> to vector<16x40xi32>
    %12 = arith.cmpi eq, %6, %11 : vector<16x40xi32>
    %cst_4 = arith.constant 0.000000e+00 : f32
    %13 = vector.broadcast %cst_4 : f32 to vector<16x40xf32>
    %14 = arith.select %12, %5, %13 : vector<16x40xi1>, vector<16x40xf32>
    %cst_5 = arith.constant dense<0.000000e+00> : vector<16xf32>
    %15 = vector.multi_reduction <add>, %14, %cst_5 [1] : vector<16x40xf32> to vector<16xf32>
    %16 = vector.shape_cast %15 : vector<16xf32> to vector<16x1xf32>
    %17 = arith.subf %10, %16 : vector<16x1xf32>
    %c-1_i32 = arith.constant -1 : i32
    %18 = vector.broadcast %c-1_i32 : i32 to vector<16x1xi32>
    %19 = arith.cmpi ne, %1, %18 : vector<16x1xi32>
    %c39_i32 = arith.constant 39 : i32
    %20 = vector.broadcast %c39_i32 : i32 to vector<16x1xi32>
    %21 = arith.cmpi eq, %1, %20 : vector<16x1xi32>
    %cst_6 = arith.constant 1.000000e-01 : f32
    %cst_7 = arith.constant 1.000000e+00 : f32
    %22 = vector.broadcast %cst_6 : f32 to vector<16x1xf32>
    %23 = vector.broadcast %cst_7 : f32 to vector<16x1xf32>
    %24 = arith.select %21, %22, %23 : vector<16x1xi1>, vector<16x1xf32>
    %cst_8 = arith.constant 0.000000e+00 : f32
    %25 = vector.broadcast %cst_8 : f32 to vector<16x1xf32>
    %26 = arith.select %19, %24, %25 : vector<16x1xi1>, vector<16x1xf32>
    %27 = arith.mulf %26, %17 : vector<16x1xf32>
    %28 = vector.shape_cast %27 : vector<16x1xf32> to vector<1x16x1xf32>
    %cst_9 = arith.constant dense<0.000000e+00> : vector<1xf32>
    %29 = vector.multi_reduction <add>, %28, %cst_9 [1, 2] : vector<1x16x1xf32> to vector<1xf32>
    %30 = vector.shape_cast %29 : vector<1xf32> to vector<1x1x1xf32>
    %31 = vector.extract %30[0, 0, 0] : f32 from vector<1x1x1xf32>
    %32 = vector.shape_cast %26 : vector<16x1xf32> to vector<1x16x1xf32>
    %cst_10 = arith.constant dense<0.000000e+00> : vector<1xf32>
    %33 = vector.multi_reduction <add>, %32, %cst_10 [1, 2] : vector<1x16x1xf32> to vector<1xf32>
    %34 = vector.shape_cast %33 : vector<1xf32> to vector<1x1x1xf32>
    %35 = vector.extract %34[0, 0, 0] : f32 from vector<1x1x1xf32>
    %36 = tpu.iota {dimensions = array<i32: 2>} : vector<1x1x128xi32>
    %c0_i32 = arith.constant 0 : i32
    %37 = vector.broadcast %c0_i32 : i32 to vector<1x1x128xi32>
    %38 = arith.cmpi eq, %36, %37 : vector<1x1x128xi32>
    %c1_i32 = arith.constant 1 : i32
    %39 = vector.broadcast %c1_i32 : i32 to vector<1x1x128xi32>
    %40 = arith.cmpi eq, %36, %39 : vector<1x1x128xi32>
    %cst_11 = arith.constant 0.000000e+00 : f32
    %41 = vector.broadcast %35 : f32 to vector<1x1x128xf32>
    %42 = vector.broadcast %cst_11 : f32 to vector<1x1x128xf32>
    %43 = arith.select %40, %41, %42 : vector<1x1x128xi1>, vector<1x1x128xf32>
    %44 = vector.broadcast %31 : f32 to vector<1x1x128xf32>
    %45 = arith.select %38, %44, %43 : vector<1x1x128xi1>, vector<1x1x128xf32>
    %c0_12 = arith.constant 0 : index
    %c0_13 = arith.constant 0 : index
    %c0_14 = arith.constant 0 : index
    %46 = vector.load %arg3[%c0_12, %c0_13, %c0_14] : memref<1x1x128xf32, #tpu.memory_space<vmem>>, vector<1x1x128xf32>
    tpu.vector_store %arg3[%c0_12, %c0_13, %c0_14], %45 {strides = array<i32>} : memref<1x1x128xf32, #tpu.memory_space<vmem>>, vector<1x1x128xf32>,
    return
  }
  func.func @transform_0(%arg0: i32) -> (i32, i32) {
    %c0_i32 = arith.constant 0 : i32
    %c0_i32_0 = arith.constant 0 : i32
    return %arg0, %c0_i32 : i32, i32
  }
  func.func @transform_1(%arg0: i32) -> (i32, i32) {
    %c0_i32 = arith.constant 0 : i32
    %c0_i32_0 = arith.constant 0 : i32
    return %arg0, %c0_i32 : i32, i32
  }
  func.func @transform_2(%arg0: i32) -> (i32, i32, i32) {
    %c0_i32 = arith.constant 0 : i32
    %c0_i32_0 = arith.constant 0 : i32
    %c0_i32_1 = arith.constant 0 : i32
    return %arg0, %c0_i32, %c0_i32_0 : i32, i32, i32
  }
}

</mosaic_0001>

<llo_original>
// kernel: tpu_custom_call.1
$region0: #{tpu_custom_call.1}
  #allocation0 [shape = 'u32[]', space=smem, size = 0x4, offset = 0x4, fixed_abs, tag = 'smem constant byte address 0x4 - core index']
  #allocation1 [shape = 'u32[72,128]{1,0:T(1,128)}', space=vmem, size = 0x9000, scoped, tag = 'internal scratch']
  %s0 = inlined_call_operand.vmem [shape: f32[32,40], index: 0, kind: input, shape index: {}]
  %s1 = inlined_call_operand.vmem [shape: s32[32,1], index: 1, kind: input, shape index: {}]
  %s2 = inlined_call_operand.hbm [shape: f32[2,1,128], index: 2, kind: output, shape index: {}]
  %s3 = sld [smem:[#allocation0]]
  $region41: #{tpu_custom_call.1} parent=0
    _
  %s5 = ssub.s32 1, %s3
  %s6 = scalar_select 0, %s5, %s3
  $region1: #{tpu_custom_call.1} parent=0
    #allocation2 [shape = 'u8[1024]{0}', space=vmem, size = 0x400, scoped, tag = 'output window, operand 0']
    #allocation3 [shape = 's32[2]{0}', space=sflag, size = 0x8, scoped, tag = 'scoped memory for tpu_custom_call.1']
    %7 = vsyncpa [#allocation3], 0
    %s8 = scalar_lea.sflag [#allocation3], 1
    %9 = vsyncpa %s8, 0
    loop: start=0, step=1, limit=4
    $region2: #{tpu_custom_call.1} parent=1 // loop_pre_header
      _
    $region3: #{tpu_custom_call.1} parent=1 // loop_header
      %s11 = sphi 0, %s15
      %p12 = scmp.ge.s32.totalorder %s11, 4
      %s21 = sphi 0, %s23
      %s24 = sphi 0, %s21
      %s25 = sphi 0, %s24
      %s41 = sphi 0, %s25
      %s47 = sphi 0, %s49
      %s50 = sphi 0, %s47
      %s51 = sphi 0, %s50
      %s67 = sphi 0, %s51
      %s73 = sphi 0, %s75
      %s76 = sphi 0, %s73
      %s77 = sphi 0, %s76
      %s93 = sphi 0, %s77
    $region4: #{tpu_custom_call.1} parent=1 // loop_header_branch
      %14 = sbr.rel (%p12) target = $region8
    $region5: #{tpu_custom_call.1} parent=1 // loop_body
      %s16 = ssub.s32 %s11, 1
      %s17 = ssub.s32 %s11, 2
      %s18 = sadd.s32 %s11, 1
      %s19 = ssub.s32 %s11, %s18
      %p20 = scmp.eq.s32.totalorder %s19, 0
      %s22 = sadd.s32 %s21, 1
      %s23 = scalar_select %p20, %s21, %s22
      %p26 = pneg %p20
      %p27 = scmp.eq.s32.totalorder %s11, 1
      %p28 = por %p26, %p27
      %p29 = scmp.ne.s32.totalorder %s21, %s24
      %p30 = scmp.eq.s32.totalorder %s11, 0
      %p31 = por %p29, %p30
      %p32 = scmp.ne.s32.totalorder %s21, %s24
      %p33 = scmp.eq.s32.totalorder %s16, 1
      %p34 = por %p32, %p33
      %p35 = scmp.ne.s32.totalorder %s24, %s25
      %p36 = scmp.eq.s32.totalorder %s16, 0
      %p37 = por %p35, %p36
      %p38 = scmp.ne.s32.totalorder %s24, %s25
      %p39 = scmp.eq.s32.totalorder %s17, 1
      %p40 = por %p38, %p39
      %p42 = scmp.ne.s32.totalorder %s25, %s41
      %p43 = scmp.eq.s32.totalorder %s17, 0
      %p44 = por %p42, %p43
      %s45 = ssub.s32 %s11, %s18
      %p46 = scmp.eq.s32.totalorder %s45, 0
      %s48 = sadd.s32 %s47, 1
      %s49 = scalar_select %p46, %s47, %s48
      %p52 = pneg %p46
      %p53 = scmp.eq.s32.totalorder %s11, 1
      %p54 = por %p52, %p53
      %p55 = scmp.ne.s32.totalorder %s47, %s50
      %p56 = scmp.eq.s32.totalorder %s11, 0
      %p57 = por %p55, %p56
      %p58 = scmp.ne.s32.totalorder %s47, %s50
      %p59 = scmp.eq.s32.totalorder %s16, 1
      %p60 = por %p58, %p59
      %p61 = scmp.ne.s32.totalorder %s50, %s51
      %p62 = scmp.eq.s32.totalorder %s16, 0
      %p63 = por %p61, %p62
      %p64 = scmp.ne.s32.totalorder %s50, %s51
      %p65 = scmp.eq.s32.totalorder %s17, 1
      %p66 = por %p64, %p65
      %p68 = scmp.ne.s32.totalorder %s51, %s67
      %p69 = scmp.eq.s32.totalorder %s17, 0
      %p70 = por %p68, %p69
      %s71 = ssub.s32 %s11, %s18
      %p72 = scmp.eq.s32.totalorder %s71, 0
      %s74 = sadd.s32 %s73, 1
      %s75 = scalar_select %p72, %s73, %s74
      %p78 = pneg %p72
      %p79 = scmp.eq.s32.totalorder %s11, 1
      %p80 = por %p78, %p79
      %p81 = scmp.ne.s32.totalorder %s73, %s76
      %p82 = scmp.eq.s32.totalorder %s11, 0
      %p83 = por %p81, %p82
      %p84 = scmp.ne.s32.totalorder %s73, %s76
      %p85 = scmp.eq.s32.totalorder %s16, 1
      %p86 = por %p84, %p85
      %p87 = scmp.ne.s32.totalorder %s76, %s77
      %p88 = scmp.eq.s32.totalorder %s16, 0
      %p89 = por %p87, %p88
      %p90 = scmp.ne.s32.totalorder %s76, %s77
      %p91 = scmp.eq.s32.totalorder %s17, 1
      %p92 = por %p90, %p91
      %p94 = scmp.ne.s32.totalorder %s77, %s93
      %p95 = scmp.eq.s32.totalorder %s17, 0
      %p96 = por %p94, %p95
      %p97 = scmp.le.s32.totalorder 1, %s11
      %p98 = scmp.lt.s32.totalorder %s11, 3
      %p99 = pnand %p97, %p98
      %p100 = pneg %p99
      // Predicated region
      $region9: #{tpu_custom_call.1} parent=5 // pred_check
        _
      $region10: #{tpu_custom_call.1} parent=5 // pred_check_branch
        %102 = sbr.rel (%p99) target = $region12
      $region11: #{tpu_custom_call.1} parent=5 // pred_region
        %s103 = ssub.s32 %s11, 1
      $region12: #{tpu_custom_call.1} parent=5 // pred_fallthru
        _
      %p104 = scmp.lt.s32.totalorder %s11, 2
      // Predicated region
      $region13: #{tpu_custom_call.1} parent=5 // pred_check
        %p105 = pneg %p104
      $region14: #{tpu_custom_call.1} parent=5 // pred_check_branch
        %107 = sbr.rel (%p105) target = $region16
      $region15: #{tpu_custom_call.1} parent=5 // pred_region
        // Predicated region
        $region17: #{tpu_custom_call.1} parent=15 // pred_check
          %p108 = pneg %p31
        $region18: #{tpu_custom_call.1} parent=15 // pred_check_branch
          %110 = sbr.rel (%p108) target = $region20
        $region19: #{tpu_custom_call.1} parent=15 // pred_region
          %s111 = smul.u32 2, %s11
          %p112 = scmp.lt.s32.totalorder %s111, 3
          %s113 = scalar_select %p112, %s111, 3
          %s114 = smul.addr %s113, 8
          %s115 = scalar_lea.vmem %s0, %s114
          %s116 = smul.u32 2, %s11
        $region20: #{tpu_custom_call.1} parent=15 // pred_fallthru
          _
        // Predicated region
        $region21: #{tpu_custom_call.1} parent=15 // pred_check
          %p117 = pneg %p57
        $region22: #{tpu_custom_call.1} parent=15 // pred_check_branch
          %119 = sbr.rel (%p117) target = $region24
        $region23: #{tpu_custom_call.1} parent=15 // pred_region
          %s120 = smul.u32 2, %s11
          %p121 = scmp.lt.s32.totalorder %s120, 3
          %s122 = scalar_select %p121, %s120, 3
          %s123 = smul.addr %s122, 8
          %s124 = scalar_lea.vmem %s1, %s123
          %s125 = smul.u32 2, %s11
        $region24: #{tpu_custom_call.1} parent=15 // pred_fallthru
          _
      $region16: #{tpu_custom_call.1} parent=5 // pred_fallthru
        _
      %p126 = scmp.le.s32.totalorder 1, %s11
      %p127 = scmp.lt.s32.totalorder %s11, 3
      %p128 = pnand %p126, %p127
      %p129 = pneg %p128
      // Predicated region
      $region25: #{tpu_custom_call.1} parent=5 // pred_check
        _
      $region26: #{tpu_custom_call.1} parent=5 // pred_check_branch
        %131 = sbr.rel (%p128) target = $region28
      $region27: #{tpu_custom_call.1} parent=5 // pred_region
        %s132 = ssub.s32 %s11, 1
        %s133 = smul.u32 2, %s16
        %p134 = scmp.lt.s32.totalorder %s133, 3
        %s135 = scalar_select %p134, %s133, 3
        %s136 = smul.addr %s135, 8
        %s137 = scalar_lea.vmem %s0, %s136
        %p138 = pneg %p37
        %p139 = pneg %p34
        %s140 = smul.u32 2, %s16
        %p141 = scmp.lt.s32.totalorder %s140, 3
        %s142 = scalar_select %p141, %s140, 3
        %s143 = smul.addr %s142, 8
        %s144 = scalar_lea.vmem %s1, %s143
        %p145 = pneg %p63
        %p146 = pneg %p60
        %p147 = pneg %p89
        %p148 = pneg %p86
        %s149 = sand.u32 %s76, 1
        %s150 = scalar_lea.sflag [#allocation3], %s149
        %s151 = sand.u32 %s76, 1
        %s152 = scalar_lea.vmem [#allocation2], %s151
        %s153 = smul.u32 2, %s16
        %p154 = scmp.lt.s32.totalorder %s153, 3
        %s155 = scalar_select %p154, %s153, 3
        %s156 = smul.addr %s155, 8
        %s157 = scalar_lea.vmem %s0, %s156
        %s158 = smul.u32 2, %s16
        %s159 = smul.u32 2, %s16
        %p160 = scmp.lt.s32.totalorder %s159, 3
        %s161 = scalar_select %p160, %s159, 3
        %s162 = smul.addr %s161, 8
        %s163 = scalar_lea.vmem %s1, %s162
        %s164 = smul.u32 2, %s16
        %v165 = vld [vmem:[%s157] sm:$0xff]
        %v166 = vld [vmem:[%s157 + $0x8] sm:$0xff]
        %v167 = vld [vmem:[%s163] sm:$0xff]
        %v168 = vld [vmem:[%s163 + $0x8] sm:$0xff]
        %vm169 = vcmask 326656
        %v170 = vsel %vm169, %v165, -inf
        %171 = vmax.xlane.f32.xlu0 %v170
        %v172 = vpop.xlane.xlu0 %171
        %v173 = vsel %vm169, %v166, -inf
        %174 = vmax.xlane.f32.xlu0 %v173
        %v175 = vpop.xlane.xlu0 %174
        %v176 = vsub.f32 %v165, %v172
        %v177 = vsub.f32 %v166, %v175
        %v178 = vlaneseq
        %v179 = vand.u32 %v178, 127
        %v180 = vmul.f32 %v176, 1.442695
        %v181 = vpow.pop %v180
        %v182 = vmul.f32 %v177, 1.442695
        %v183 = vpow.pop %v182
        %v184 = vsel %vm169, %v181, 0.0
        %185 = vadd.xlane.f32.xlu0 %v184
        %v186 = vpop.xlane.xlu0 %185
        %v187 = vsel %vm169, %v183, 0.0
        %188 = vadd.xlane.f32.xlu0 %v187
        %v189 = vpop.xlane.xlu0 %188
        %v190 = vlog2.pop %v186
        %v191 = vmul.f32 %v190, 0.6931472
        %v192 = vlog2.pop %v189
        %v193 = vmul.f32 %v192, 0.6931472
        %194 = vset.pattern.permute.xlu0 0
        %195 = vperm.xlu0 %194, %v167
        %v196 = vpop.permute.xlu0 %195
        %197 = vset.pattern.permute.xlu0 0
        %198 = vperm.xlu0 %197, %v168
        %v199 = vpop.permute.xlu0 %198
        %vm200 = vcmp.eq.s32.totalorder %v179, %v196
        %vm201 = vcmp.eq.s32.totalorder %v179, %v199
        %v202 = vsel %vm200, %v176, 0.0
        %v203 = vsel %vm201, %v177, 0.0
        %v204 = vsel %vm169, %v202, 0.0
        %205 = vadd.xlane.f32.xlu0 %v204
        %v206 = vpop.xlane.xlu0 %205
        %v207 = vsel %vm169, %v203, 0.0
        %208 = vadd.xlane.f32.xlu0 %v207
        %v209 = vpop.xlane.xlu0 %208
        %v210 = vsub.f32 %v191, %v206
        %v211 = vsub.f32 %v193, %v209
        %vm212 = vcmp.ne.s32.totalorder %v167, 4294967295
        %vm213 = vcmp.ne.s32.totalorder %v168, 4294967295
        %vm214 = vcmp.eq.s32.totalorder %v167, 39
        %vm215 = vcmp.eq.s32.totalorder %v168, 39
        %v216 = vsel %vm214, 0.1, 1.0
        %v217 = vsel %vm215, 0.1, 1.0
        %v218 = vsel %vm212, %v216, 0.0
        %v219 = vsel %vm213, %v217, 0.0
        %v220 = vmul.f32 %v218, %v210
        %v221 = vmul.f32 %v219, %v211
        %vm222 = vcmask 7168
        %v223 = vsel %vm222, %v220, 0.0
        %v224 = vsel %vm222, %v221, 0.0
        %v225 = vadd.f32 %v223, %v224
        %226 = vadd.xlane.f32.xlu0 %v225
        %v227 = vpop.xlane.xlu0 %226
        %v228 = vrot.slane %v227, 4
        %v229 = vadd.f32 %v227, %v228
        %v230 = vrot.slane %v229, 2
        %v231 = vadd.f32 %v229, %v230
        %v232 = vrot.slane %v231, 1
        %v233 = vadd.f32 %v231, %v232
        %s234 = vtos %v233
        %v235 = vsel %vm222, %v218, 0.0
        %v236 = vsel %vm222, %v219, 0.0
        %v237 = vadd.f32 %v235, %v236
        %238 = vadd.xlane.f32.xlu0 %v237
        %v239 = vpop.xlane.xlu0 %238
        %v240 = vrot.slane %v239, 4
        %v241 = vadd.f32 %v239, %v240
        %v242 = vrot.slane %v241, 2
        %v243 = vadd.f32 %v241, %v242
        %v244 = vrot.slane %v243, 1
        %v245 = vadd.f32 %v243, %v244
        %s246 = vtos %v245
        %vm247 = vcmp.eq.s32.totalorder %v179, 0
        %vm248 = vcmp.eq.s32.totalorder %v179, 1
        %v249 = vstv %s246
        %v250 = vsel %vm248, %v249, 0.0
        %v251 = vstv %s234
        %v252 = vsel %vm247, %v251, %v250
        %253 = vst [vmem:[%s152] sm:$0x1] %v252
        %s254 = sand.u32 %s76, 1
        %s255 = scalar_lea.sflag [#allocation3], %s254
        %s256 = sand.u32 %s76, 1
        %s257 = scalar_lea.vmem [#allocation2], %s256
        // Predicated region
        $region29: #{tpu_custom_call.1} parent=27 // pred_check
          %p258 = pneg %p86
        $region30: #{tpu_custom_call.1} parent=27 // pred_check_branch
          %260 = sbr.rel (%p258) target = $region32
        $region31: #{tpu_custom_call.1} parent=27 // pred_region
          %262 = vsyncadd %s255, 0
          %s263 = scalar_lea.hbm %s2, %s16
          %s265 = sshll.u32 %s257, 4
          %s266 = int_to_ptr.vmem [resolvable:$true] %s265
          %s267 = sshll.u32 %s263, 4
          %s268 = int_to_ptr.hbm [resolvable:$true] %s267
          %270 = dma.vmem_to_hbm [thread:$0]  %s266, 16, %s268, %s255
        $region32: #{tpu_custom_call.1} parent=27 // pred_fallthru
          _
      $region28: #{tpu_custom_call.1} parent=5 // pred_fallthru
        _
      %p271 = scmp.le.s32.totalorder 2, %s11
      // Predicated region
      $region33: #{tpu_custom_call.1} parent=5 // pred_check
        %p272 = pneg %p271
      $region34: #{tpu_custom_call.1} parent=5 // pred_check_branch
        %274 = sbr.rel (%p272) target = $region36
      $region35: #{tpu_custom_call.1} parent=5 // pred_region
        %s275 = ssub.s32 %s11, 2
        // Predicated region
        $region37: #{tpu_custom_call.1} parent=35 // pred_check
          %p276 = pneg %p92
        $region38: #{tpu_custom_call.1} parent=35 // pred_check_branch
          %278 = sbr.rel (%p276) target = $region40
        $region39: #{tpu_custom_call.1} parent=35 // pred_region
          %s279 = sand.u32 %s77, 1
          %s280 = scalar_lea.sflag [#allocation3], %s279
          %s281 = sand.u32 %s77, 1
          %s282 = scalar_lea.vmem [#allocation2], %s281
          %284 = dma.done %s280, 16
        $region40: #{tpu_custom_call.1} parent=35 // pred_fallthru
          _
      $region36: #{tpu_custom_call.1} parent=5 // pred_fallthru
        _
    $region6: #{tpu_custom_call.1} parent=1 // loop_footer
      %s15 = sadd.s32 1, %s11
    $region7: #{tpu_custom_call.1} parent=1 // loop_footer_branch
      %10 = sbr.rel target = $region3
    $region8: #{tpu_custom_call.1} parent=1 // loop_exit
      _
    %285 = vsyncpa [#allocation3], 1
    %s286 = scalar_lea.sflag [#allocation3], 1
    %287 = vsyncpa %s286, 1

</llo_original>
